<compile_context>
chip_gen: v6e
topology: v6e:2x2x1
jax: 0.10.0
libtpu: 0.0.40
codegen_flags: <defaults>
</compile_context>

<pallas_src>
import functools

import jax
import jax.numpy as jnp
from jax.experimental import pallas as pl
from jax.experimental.pallas import tpu as pltpu

EPS = 1e-5  # nn.LayerNorm default


def _round_up(x, m):
    return (x + m - 1) // m * m


def _vmem_capacity_bytes():
    # Generation-aware budget; conservative fallback (v7x per-TC VMEM).
    try:
        return int(pltpu.get_tpu_info().vmem_capacity_bytes)
    except Exception:
        return 64 * 1024 * 1024


def _prenorm_kernel(x_ref, wt_ref, pgb_ref, o_ref, acc_ref, *,
                    inv_d, d_true, d_pad):
    """Grid = (row_blocks, k_blocks).

    Accumulates x @ W^T over the K axis into an f32 scratch; on the last K
    block adds the bias and applies LayerNorm (two-pass variance), then casts
    once at the store.  pgb_ref rows are [bias, gamma, beta] in f32.
    """
    k = pl.program_id(1)

    @pl.when(k == 0)
    def _init():
        acc_ref[...] = jnp.zeros_like(acc_ref)

    # Natural-layout MXU matmul: W^T pre-transposed in the wrapper, operands
    # in their native (or opt-in bf16) dtype, f32 accumulation.
    acc_ref[...] += jnp.dot(x_ref[...], wt_ref[...],
                            preferred_element_type=jnp.float32)

    @pl.when(k == pl.num_programs(1) - 1)
    def _epilogue():
        y = acc_ref[...] + pgb_ref[0:1, :]                  # + bias (f32)
        # Padded lanes of y are exactly zero (zero-padded W^T columns & bias),
        # so the mean over the true D is exact with a static 1/D multiply.
        mean = jnp.sum(y, axis=-1, keepdims=True) * inv_d
        d = y - mean
        if d_true != d_pad:  # static: keep padded lanes out of the variance
            lane = jax.lax.broadcasted_iota(jnp.int32, d.shape, 1)
            d = jnp.where(lane < d_true, d, 0.0)
        var = jnp.sum(d * d, axis=-1, keepdims=True) * inv_d
        y_hat = d * jax.lax.rsqrt(var + EPS)
        o_ref[...] = (y_hat * pgb_ref[1:2, :]
                      + pgb_ref[2:3, :]).astype(o_ref.dtype)


def prenorm(x, w, b, gamma, beta, *, matmul_dtype=None):
    """Fused Linear(dim, dim) -> LayerNorm(dim).

    x: (B, S, D); w: (D, D) nn.Linear weight (out, in); b, gamma, beta: (D,).
    matmul_dtype: optional (e.g. jnp.bfloat16) dtype for the MXU operands.
    """
    B, S, D = x.shape
    R = B * S
    out_dtype = x.dtype
    in_dtype = jnp.dtype(matmul_dtype) if matmul_dtype is not None else jnp.dtype(x.dtype)
    out_item = jnp.dtype(out_dtype).itemsize

    # ---- lane-dense feature padding --------------------------------------
    D_pad = _round_up(max(D, 128), 128)
    if D > 128 and D_pad % 256 != 0:
        D_pad += 128   # full 256-wide MXU passes on v6e/v7x; harmless on v5e

    sublane = max(8, 32 // max(in_dtype.itemsize, 1))

    # ---- generation-aware VMEM budget & joint (row_tile, k_tile) choice ---
    vmem_cap = _vmem_capacity_bytes()
    budget = int(vmem_cap * 0.65)   # ~41 MiB on v7x (64 MiB), ~83 MiB on v5e/v6e

    def footprint(rt, kt):
        return (2 * rt * kt * in_dtype.itemsize      # x tiles (double-buffered)
                + 2 * kt * D_pad * in_dtype.itemsize  # W^T tiles (double-buffered)
                + 2 * rt * D_pad * out_item           # out tiles (double-buffered)
                + rt * D_pad * 4                      # f32 accumulator scratch
                + 2 * 8 * D_pad * 4)                  # (3, D_pad) params tile

    # K-tile candidates: multiples of 128 dividing D_pad, largest first.
    k_cands = [kt for kt in range(D_pad, 127, -128) if D_pad % kt == 0]

    # Row tile: large (amortizes ~0.35us/step overhead), but capped so the
    # "parallel" row axis gets >= 2 blocks (both v7x TensorCores busy).
    rt = min(512, _round_up(R, sublane))
    if R > sublane:
        rt = min(rt, _round_up((R + 1) // 2, sublane))
    rt = max(rt, sublane)

    k_tile = k_cands[-1]
    while True:
        fitted = False
        for kt in k_cands:
            if footprint(rt, kt) <= budget:
                k_tile = kt
                fitted = True
                break
        if fitted or rt <= sublane:
            break
        rt = max(sublane, _round_up(rt // 2, sublane))
    row_tile = rt

    R_pad = _round_up(R, row_tile)
    grid = (R_pad // row_tile, D_pad // k_tile)

    vmem_limit = int(min(vmem_cap, max(budget, footprint(row_tile, k_tile) + (2 << 20))))

    # ---- one-time layout prep (fuses with the kernel under jit) -----------
    # Pads are skipped entirely when shapes are already aligned.
    x2 = x.reshape(R, D).astype(in_dtype)
    if D_pad != D or R_pad != R:
        x2 = jnp.pad(x2, ((0, R_pad - R), (0, D_pad - D)))
    wt = jnp.transpose(w).astype(in_dtype)                 # (in, out) layout
    if D_pad != D:
        wt = jnp.pad(wt, ((0, D_pad - D), (0, D_pad - D)))
    pgb = jnp.stack([b, gamma, beta]).astype(jnp.float32)  # (3, D): bias/gamma/beta
    if D_pad != D:
        pgb = jnp.pad(pgb, ((0, 0), (0, D_pad - D)))

    cost = pl.CostEstimate(
        flops=int(2 * R_pad * D_pad * D_pad + 10 * R_pad * D_pad),
        transcendentals=int(R_pad),
        bytes_accessed=int(x2.size * x2.dtype.itemsize
                           + grid[0] * wt.size * wt.dtype.itemsize
                           + pgb.size * 4
                           + R_pad * D_pad * out_item),
    )

    kernel = functools.partial(_prenorm_kernel,
                               inv_d=1.0 / D, d_true=D, d_pad=D_pad)

    out = pl.pallas_call(
        kernel,
        out_shape=jax.ShapeDtypeStruct((R_pad, D_pad), out_dtype),
        grid_spec=pltpu.PrefetchScalarGridSpec(
            num_scalar_prefetch=0,
            grid=grid,
            in_specs=[
                pl.BlockSpec((row_tile, k_tile), lambda i, k: (i, k)),  # x rows
                pl.BlockSpec((k_tile, D_pad), lambda i, k: (k, 0)),     # W^T
                pl.BlockSpec((3, D_pad), lambda i, k: (0, 0)),          # bias/gamma/beta
            ],
            out_specs=pl.BlockSpec((row_tile, D_pad), lambda i, k: (i, 0)),
            scratch_shapes=[pltpu.VMEM((row_tile, D_pad), jnp.float32)],
        ),
        compiler_params=pltpu.CompilerParams(
            dimension_semantics=("parallel", "arbitrary"),
            vmem_limit_bytes=vmem_limit),
        cost_estimate=cost,
    )(x2, wt, pgb)

    if R_pad != R or D_pad != D:
        out = out[:R, :D]
    return out.reshape(B, S, D)


def prenorm_ref(x, w, b, gamma, beta):
    y = jnp.einsum("bsd,od->bso", x.astype(jnp.float32),
                   w.astype(jnp.float32)) + b
    mean = jnp.mean(y, axis=-1, keepdims=True)
    var = jnp.mean((y - mean) ** 2, axis=-1, keepdims=True)
    return ((y - mean) * jax.lax.rsqrt(var + EPS)) * gamma + beta


if __name__ == "__main__":
    key = jax.random.PRNGKey(0)
    k_x, k_w, k_b = jax.random.split(key, 3)

    B, S, D = 2, 8, 32
    x = jax.random.normal(k_x, (B, S, D), dtype=jnp.float32)

    # Deterministic parameter init (synthetic; not a checkpoint load).
    # TODO(synk): `fn` is an arbitrary sub-module in the spec; instantiated
    # here as a Linear(dim, dim) so PreNorm can be fused into one kernel.
    bound = 1.0 / (D ** 0.5)
    w = jax.random.uniform(k_w, (D, D), jnp.float32, -bound, bound)   # fn: Linear(dim, dim)
    b = jax.random.uniform(k_b, (D,), jnp.float32, -bound, bound)
    gamma = jnp.ones((D,), jnp.float32)   # nn.LayerNorm weight
    beta = jnp.zeros((D,), jnp.float32)   # nn.LayerNorm bias

    # jit so the wrapper-side transpose/pad fuses with the kernel instead of
    # running as separate un-fused XLA ops on every call.
    prenorm_jit = jax.jit(prenorm)
    out = jax.block_until_ready(prenorm_jit(x, w, b, gamma, beta))
    ref = prenorm_ref(x, w, b, gamma, beta)

    assert out.shape == (B, S, D)
    assert jnp.allclose(out, ref, atol=2e-5, rtol=1e-5), "mismatch vs reference"
    print("KERNEL_OK")
</pallas_src>

<mosaic_0001>
module attributes {stable_mosaic.version = 11 : i64} {
  func.func @_prenorm_kernel(%arg0: i32, %arg1: i32, %arg2: memref<8x128xf32, #tpu.memory_space<vmem>>, %arg3: memref<128x128xf32, #tpu.memory_space<vmem>>, %arg4: memref<3x128xf32, #tpu.memory_space<vmem>>, %arg5: memref<8x128xf32, #tpu.memory_space<vmem>>, %arg6: memref<8x128xf32, #tpu.memory_space<vmem>>) attributes {dimension_semantics = [#tpu.dimension_semantics<parallel>, #tpu.dimension_semantics<arbitrary>], iteration_bounds = array<i64: 2, 1>, scalar_prefetch = 0 : i64, scratch_operands = 1 : i64, tpu.core_type = #tpu.core_type<tc>, window_params = [{transform_indices = @transform_0, window_bounds = array<i64: 8, 128>}, {transform_indices = @transform_1, window_bounds = array<i64: 128, 128>}, {pipeline_mode = #tpu.pipeline_mode<synchronous>, transform_indices = @transform_2, window_bounds = array<i64: 3, 128>}, {transform_indices = @transform_3, window_bounds = array<i64: 8, 128>}]} {
    %c0_i32 = arith.constant 0 : i32
    %0 = arith.cmpi eq, %arg1, %c0_i32 : i32
    %1 = arith.extui %0 : i1 to i32
    %c0_i32_0 = arith.constant 0 : i32
    %2 = arith.cmpi ne, %1, %c0_i32_0 : i32
    scf.if %2 {
      %cst_10 = arith.constant 0.000000e+00 : f32
      %12 = vector.broadcast %cst_10 : f32 to vector<8x128xf32>
      %c0_11 = arith.constant 0 : index
      %c0_12 = arith.constant 0 : index
      %13 = vector.load %arg6[%c0_11, %c0_12] : memref<8x128xf32, #tpu.memory_space<vmem>>, vector<8x128xf32>
      tpu.vector_store %arg6[%c0_11, %c0_12], %12 {strides = array<i32>} : memref<8x128xf32, #tpu.memory_space<vmem>>, vector<8x128xf32>,
    } else {
    }
    %c0 = arith.constant 0 : index
    %c0_1 = arith.constant 0 : index
    %3 = vector.load %arg6[%c0, %c0_1] : memref<8x128xf32, #tpu.memory_space<vmem>>, vector<8x128xf32>
    %c0_2 = arith.constant 0 : index
    %c0_3 = arith.constant 0 : index
    %4 = vector.load %arg2[%c0_2, %c0_3] : memref<8x128xf32, #tpu.memory_space<vmem>>, vector<8x128xf32>
    %c0_4 = arith.constant 0 : index
    %c0_5 = arith.constant 0 : index
    %5 = vector.load %arg3[%c0_4, %c0_5] : memref<128x128xf32, #tpu.memory_space<vmem>>, vector<128x128xf32>
    %cst = arith.constant dense<0.000000e+00> : vector<8x128xf32>
    %6 = tpu.matmul %4, %5, %cst {dimension_numbers = #tpu.dot_dimension_numbers<[1], [0], [0], [1], [0, 0, 1, 1], [], []>} : vector<8x128xf32>, vector<128x128xf32>, vector<8x128xf32> -> vector<8x128xf32>
    %7 = arith.addf %3, %6 : vector<8x128xf32>
    %c0_6 = arith.constant 0 : index
    %c0_7 = arith.constant 0 : index
    %8 = vector.load %arg6[%c0_6, %c0_7] : memref<8x128xf32, #tpu.memory_space<vmem>>, vector<8x128xf32>
    tpu.vector_store %arg6[%c0_6, %c0_7], %7 {strides = array<i32>} : memref<8x128xf32, #tpu.memory_space<vmem>>, vector<8x128xf32>,
    %c0_i32_8 = arith.constant 0 : i32
    %9 = arith.cmpi eq, %arg1, %c0_i32_8 : i32
    %10 = arith.extui %9 : i1 to i32
    %c0_i32_9 = arith.constant 0 : i32
    %11 = arith.cmpi ne, %10, %c0_i32_9 : i32
    scf.if %11 {
      %c0_10 = arith.constant 0 : index
      %c0_11 = arith.constant 0 : index
      %12 = vector.load %arg6[%c0_10, %c0_11] : memref<8x128xf32, #tpu.memory_space<vmem>>, vector<8x128xf32>
      %c0_12 = arith.constant 0 : index
      %c0_13 = arith.constant 0 : index
      %13 = vector.load %arg4[%c0_12, %c0_13] : memref<3x128xf32, #tpu.memory_space<vmem>>, vector<1x128xf32>
      %14 = vector.broadcast %13 : vector<1x128xf32> to vector<8x128xf32>
      %15 = arith.addf %12, %14 : vector<8x128xf32>
      %cst_14 = arith.constant dense<0.000000e+00> : vector<8xf32>
      %16 = vector.multi_reduction <add>, %15, %cst_14 [1] : vector<8x128xf32> to vector<8xf32>
      %17 = vector.shape_cast %16 : vector<8xf32> to vector<8x1xf32>
      %cst_15 = arith.constant 3.125000e-02 : f32
      %18 = vector.broadcast %cst_15 : f32 to vector<8x1xf32>
      %19 = arith.mulf %17, %18 : vector<8x1xf32>
      %20 = vector.broadcast %19 : vector<8x1xf32> to vector<8x128xf32>
      %21 = arith.subf %15, %20 : vector<8x128xf32>
      %22 = tpu.iota {dimensions = array<i32: 1>} : vector<8x128xi32>
      %c32_i32 = arith.constant 32 : i32
      %23 = vector.broadcast %c32_i32 : i32 to vector<8x128xi32>
      %24 = arith.cmpi slt, %22, %23 : vector<8x128xi32>
      %cst_16 = arith.constant 0.000000e+00 : f32
      %25 = vector.broadcast %cst_16 : f32 to vector<8x128xf32>
      %26 = arith.select %24, %21, %25 : vector<8x128xi1>, vector<8x128xf32>
      %27 = arith.mulf %26, %26 : vector<8x128xf32>
      %cst_17 = arith.constant dense<0.000000e+00> : vector<8xf32>
      %28 = vector.multi_reduction <add>, %27, %cst_17 [1] : vector<8x128xf32> to vector<8xf32>
      %29 = vector.shape_cast %28 : vector<8xf32> to vector<8x1xf32>
      %cst_18 = arith.constant 3.125000e-02 : f32
      %30 = vector.broadcast %cst_18 : f32 to vector<8x1xf32>
      %31 = arith.mulf %29, %30 : vector<8x1xf32>
      %cst_19 = arith.constant 9.99999974E-6 : f32
      %32 = vector.broadcast %cst_19 : f32 to vector<8x1xf32>
      %33 = arith.addf %31, %32 : vector<8x1xf32>
      %34 = math.rsqrt %33 : vector<8x1xf32>
      %35 = vector.broadcast %34 : vector<8x1xf32> to vector<8x128xf32>
      %36 = arith.mulf %26, %35 : vector<8x128xf32>
      %c1 = arith.constant 1 : index
      %c0_20 = arith.constant 0 : index
      %37 = vector.load %arg4[%c1, %c0_20] : memref<3x128xf32, #tpu.memory_space<vmem>>, vector<1x128xf32>
      %38 = vector.broadcast %37 : vector<1x128xf32> to vector<8x128xf32>
      %39 = arith.mulf %36, %38 : vector<8x128xf32>
      %c2 = arith.constant 2 : index
      %c0_21 = arith.constant 0 : index
      %40 = vector.load %arg4[%c2, %c0_21] : memref<3x128xf32, #tpu.memory_space<vmem>>, vector<1x128xf32>
      %41 = vector.broadcast %40 : vector<1x128xf32> to vector<8x128xf32>
      %42 = arith.addf %39, %41 : vector<8x128xf32>
      %c0_22 = arith.constant 0 : index
      %c0_23 = arith.constant 0 : index
      %43 = vector.load %arg5[%c0_22, %c0_23] : memref<8x128xf32, #tpu.memory_space<vmem>>, vector<8x128xf32>
      tpu.vector_store %arg5[%c0_22, %c0_23], %42 {strides = array<i32>} : memref<8x128xf32, #tpu.memory_space<vmem>>, vector<8x128xf32>,
    } else {
    }
    return
  }
  func.func @transform_0(%arg0: i32, %arg1: i32) -> (i32, i32) {
    %c0_i32 = arith.constant 0 : i32
    return %arg0, %arg1 : i32, i32
  }
  func.func @transform_1(%arg0: i32, %arg1: i32) -> (i32, i32) {
    %c0_i32 = arith.constant 0 : i32
    %c0_i32_0 = arith.constant 0 : i32
    return %arg1, %c0_i32 : i32, i32
  }
  func.func @transform_2(%arg0: i32, %arg1: i32) -> (i32, i32) {
    %c0_i32 = arith.constant 0 : i32
    %c0_i32_0 = arith.constant 0 : i32
    %c0_i32_1 = arith.constant 0 : i32
    return %c0_i32, %c0_i32_0 : i32, i32
  }
  func.func @transform_3(%arg0: i32, %arg1: i32) -> (i32, i32) {
    %c0_i32 = arith.constant 0 : i32
    %c0_i32_0 = arith.constant 0 : i32
    return %arg0, %c0_i32 : i32, i32
  }
}

</mosaic_0001>

<llo_original>
// kernel: prenorm.1
$region0: #{prenorm.1}
  #allocation0 [shape = 'u32[]', space=smem, size = 0x4, offset = 0x4, fixed_abs, tag = 'smem constant byte address 0x4 - core index']
  #allocation1 [shape = 'u32[144,128]{1,0:T(1,128)}', space=vmem, size = 0x12000, scoped, tag = 'internal scratch']
  #allocation2 [shape = 'f32[8,128]{1,0:T(8,128)}', space=vmem, size = 0x1000, scoped, tag = 'scratch operand']
  %s0 = inlined_call_operand.vmem [shape: f32[16,128], index: 0, kind: input, shape index: {}]
  %s1 = inlined_call_operand.vmem [shape: f32[128,128], index: 1, kind: input, shape index: {}]
  %s2 = inlined_call_operand.vmem [shape: f32[3,128], index: 2, kind: input, shape index: {}]
  %s3 = inlined_call_operand.vmem [shape: f32[16,128], index: 3, kind: output, shape index: {}]
  %s4 = sld [smem:[#allocation0]]
  $region53: #{prenorm.1} parent=0
    _
  %s6 = ssub.s32 1, %s4
  %s7 = scalar_select 0, %s6, %s4
  loop: start=0, step=1, limit=4
  $region2: #{prenorm.1} parent=0 // loop_pre_header
    _
  $region3: #{prenorm.1} parent=0 // loop_header
    %s9 = sphi 0, %s13
    %p10 = scmp.ge.s32.totalorder %s9, 4
    %s16 = sphi 0, %s28
    %s17 = sphi 0, %s24
    %s18 = sphi 0, %s16
    %s19 = sphi 0, %s17
    %s20 = sphi 0, %s18
    %s21 = sphi 0, %s19
    %s33 = sphi 0, %s35
    %s36 = sphi 0, %s33
    %s37 = sphi 0, %s36
    %s53 = sphi 0, %s37
    %s59 = sphi 0, %s61
    %s62 = sphi 0, %s59
    %s63 = sphi 0, %s62
    %s79 = sphi 0, %s63
    %s83 = sphi 0, %s83
    %s85 = sphi 0, %s83
    %s86 = sphi 0, %s85
    %s100 = sphi 0, %s86
    %s106 = sphi 0, %s108
    %s109 = sphi 0, %s106
    %s110 = sphi 0, %s109
    %s126 = sphi 0, %s110
  $region4: #{prenorm.1} parent=0 // loop_header_branch
    %12 = sbr.rel (%p10) target = $region8
  $region5: #{prenorm.1} parent=0 // loop_body
    %s14 = ssub.s32 %s9, 1
    %s15 = ssub.s32 %s9, 2
    %s22 = sadd.s32 1, %s17
    %p23 = scmp.ge.s32.totalorder %s22, 1
    %s24 = scalar_select %p23, 0, %s22
    %s25 = sadd.s32 1, %s16
    %s26 = scalar_select %p23, %s25, %s16
    %p27 = scmp.ge.s32.totalorder %s26, 2
    %s28 = scalar_select %p27, 0, %s26
    %s29 = ssub.s32 %s16, %s28
    %s30 = ssub.s32 %s17, %s24
    %s31 = sor.u32 %s29, %s30
    %p32 = scmp.eq.s32.totalorder %s31, 0
    %s34 = sadd.s32 %s33, 1
    %s35 = scalar_select %p32, %s33, %s34
    %p38 = pneg %p32
    %p39 = scmp.eq.s32.totalorder %s9, 1
    %p40 = por %p38, %p39
    %p41 = scmp.ne.s32.totalorder %s33, %s36
    %p42 = scmp.eq.s32.totalorder %s9, 0
    %p43 = por %p41, %p42
    %p44 = scmp.ne.s32.totalorder %s33, %s36
    %p45 = scmp.eq.s32.totalorder %s14, 1
    %p46 = por %p44, %p45
    %p47 = scmp.ne.s32.totalorder %s36, %s37
    %p48 = scmp.eq.s32.totalorder %s14, 0
    %p49 = por %p47, %p48
    %p50 = scmp.ne.s32.totalorder %s36, %s37
    %p51 = scmp.eq.s32.totalorder %s15, 1
    %p52 = por %p50, %p51
    %p54 = scmp.ne.s32.totalorder %s37, %s53
    %p55 = scmp.eq.s32.totalorder %s15, 0
    %p56 = por %p54, %p55
    %s57 = ssub.s32 %s17, %s24
    %p58 = scmp.eq.s32.totalorder %s57, 0
    %s60 = sadd.s32 %s59, 1
    %s61 = scalar_select %p58, %s59, %s60
    %p64 = pneg %p58
    %p65 = scmp.eq.s32.totalorder %s9, 1
    %p66 = por %p64, %p65
    %p67 = scmp.ne.s32.totalorder %s59, %s62
    %p68 = scmp.eq.s32.totalorder %s9, 0
    %p69 = por %p67, %p68
    %p70 = scmp.ne.s32.totalorder %s59, %s62
    %p71 = scmp.eq.s32.totalorder %s14, 1
    %p72 = por %p70, %p71
    %p73 = scmp.ne.s32.totalorder %s62, %s63
    %p74 = scmp.eq.s32.totalorder %s14, 0
    %p75 = por %p73, %p74
    %p76 = scmp.ne.s32.totalorder %s62, %s63
    %p77 = scmp.eq.s32.totalorder %s15, 1
    %p78 = por %p76, %p77
    %p80 = scmp.ne.s32.totalorder %s63, %s79
    %p81 = scmp.eq.s32.totalorder %s15, 0
    %p82 = por %p80, %p81
    %s84 = sadd.s32 %s83, 1
    %p87 = scmp.eq.s32.totalorder %s9, 1
    %p88 = scmp.ne.s32.totalorder %s83, %s85
    %p89 = scmp.eq.s32.totalorder %s9, 0
    %p90 = por %p88, %p89
    %p91 = scmp.ne.s32.totalorder %s83, %s85
    %p92 = scmp.eq.s32.totalorder %s14, 1
    %p93 = por %p91, %p92
    %p94 = scmp.ne.s32.totalorder %s85, %s86
    %p95 = scmp.eq.s32.totalorder %s14, 0
    %p96 = por %p94, %p95
    %p97 = scmp.ne.s32.totalorder %s85, %s86
    %p98 = scmp.eq.s32.totalorder %s15, 1
    %p99 = por %p97, %p98
    %p101 = scmp.ne.s32.totalorder %s86, %s100
    %p102 = scmp.eq.s32.totalorder %s15, 0
    %p103 = por %p101, %p102
    %s104 = ssub.s32 %s16, %s28
    %p105 = scmp.eq.s32.totalorder %s104, 0
    %s107 = sadd.s32 %s106, 1
    %s108 = scalar_select %p105, %s106, %s107
    %p111 = pneg %p105
    %p112 = scmp.eq.s32.totalorder %s9, 1
    %p113 = por %p111, %p112
    %p114 = scmp.ne.s32.totalorder %s106, %s109
    %p115 = scmp.eq.s32.totalorder %s9, 0
    %p116 = por %p114, %p115
    %p117 = scmp.ne.s32.totalorder %s106, %s109
    %p118 = scmp.eq.s32.totalorder %s14, 1
    %p119 = por %p117, %p118
    %p120 = scmp.ne.s32.totalorder %s109, %s110
    %p121 = scmp.eq.s32.totalorder %s14, 0
    %p122 = por %p120, %p121
    %p123 = scmp.ne.s32.totalorder %s109, %s110
    %p124 = scmp.eq.s32.totalorder %s15, 1
    %p125 = por %p123, %p124
    %p127 = scmp.ne.s32.totalorder %s110, %s126
    %p128 = scmp.eq.s32.totalorder %s15, 0
    %p129 = por %p127, %p128
    %p130 = scmp.le.s32.totalorder 1, %s9
    %p131 = scmp.lt.s32.totalorder %s9, 3
    %p132 = pnand %p130, %p131
    %p133 = pneg %p132
    // Predicated region
    $region9: #{prenorm.1} parent=5 // pred_check
      _
    $region10: #{prenorm.1} parent=5 // pred_check_branch
      %135 = sbr.rel (%p132) target = $region12
    $region11: #{prenorm.1} parent=5 // pred_region
      %s136 = ssub.s32 %s9, 1
      // Predicated region
      $region13: #{prenorm.1} parent=11 // pred_check
        %p137 = pneg %p75
      $region14: #{prenorm.1} parent=11 // pred_check_branch
        %139 = sbr.rel (%p137) target = $region16
      $region15: #{prenorm.1} parent=11 // pred_region
        %s140 = smul.u32 16, %s19
        %p141 = scmp.lt.s32.totalorder %s140, 15
        %s142 = scalar_select %p141, %s140, 15
        %s143 = smul.addr %s142, 8
        %s144 = scalar_lea.vmem %s1, %s143
        %s145 = smul.u32 16, %s19
      $region16: #{prenorm.1} parent=11 // pred_fallthru
        _
      // Predicated region
      $region17: #{prenorm.1} parent=11 // pred_check
        %p146 = pneg %p96
      $region18: #{prenorm.1} parent=11 // pred_check_branch
        %148 = sbr.rel (%p146) target = $region20
      $region19: #{prenorm.1} parent=11 // pred_region
        _
      $region20: #{prenorm.1} parent=11 // pred_fallthru
        _
    $region12: #{prenorm.1} parent=5 // pred_fallthru
      _
    %p149 = scmp.lt.s32.totalorder %s9, 2
    // Predicated region
    $region21: #{prenorm.1} parent=5 // pred_check
      %p150 = pneg %p149
    $region22: #{prenorm.1} parent=5 // pred_check_branch
      %152 = sbr.rel (%p150) target = $region24
    $region23: #{prenorm.1} parent=5 // pred_region
      // Predicated region
      $region25: #{prenorm.1} parent=23 // pred_check
        %p153 = pneg %p43
      $region26: #{prenorm.1} parent=23 // pred_check_branch
        %155 = sbr.rel (%p153) target = $region28
      $region27: #{prenorm.1} parent=23 // pred_region
        %p156 = scmp.lt.s32.totalorder %s16, 1
        %s157 = scalar_select %p156, %s16, 1
        %p158 = scmp.lt.s32.totalorder %s17, 0
        %s159 = scalar_select %p158, %s17, 0
        %s160 = sadd.s32 %s159, %s157
        %s161 = smul.addr %s160, 8
        %s162 = scalar_lea.vmem %s0, %s161
      $region28: #{prenorm.1} parent=23 // pred_fallthru
        _
    $region24: #{prenorm.1} parent=5 // pred_fallthru
      _
    %p163 = scmp.le.s32.totalorder 1, %s9
    %p164 = scmp.lt.s32.totalorder %s9, 3
    %p165 = pnand %p163, %p164
    %p166 = pneg %p165
    // Predicated region
    $region29: #{prenorm.1} parent=5 // pred_check
      _
    $region30: #{prenorm.1} parent=5 // pred_check_branch
      %168 = sbr.rel (%p165) target = $region32
    $region31: #{prenorm.1} parent=5 // pred_region
      %s169 = ssub.s32 %s9, 1
      %p170 = scmp.lt.s32.totalorder %s18, 1
      %s171 = scalar_select %p170, %s18, 1
      %p172 = scmp.lt.s32.totalorder %s19, 0
      %s173 = scalar_select %p172, %s19, 0
      %s174 = sadd.s32 %s173, %s171
      %s175 = smul.addr %s174, 8
      %s176 = scalar_lea.vmem %s0, %s175
      %p177 = pneg %p49
      %p178 = pneg %p46
      %s179 = smul.u32 16, %s19
      %p180 = scmp.lt.s32.totalorder %s179, 15
      %s181 = scalar_select %p180, %s179, 15
      %s182 = smul.addr %s181, 8
      %s183 = scalar_lea.vmem %s1, %s182
      %p184 = pneg %p75
      %p185 = pneg %p72
      %p186 = pneg %p96
      %p187 = pneg %p93
      %p188 = pneg %p122
      %p189 = pneg %p119
      %p190 = scmp.lt.s32.totalorder %s18, 1
      %s191 = scalar_select %p190, %s18, 1
      %s192 = smul.addr %s191, 8
      %s193 = scalar_lea.vmem %s3, %s192
      %p194 = scmp.lt.s32.totalorder %s18, 1
      %s195 = scalar_select %p194, %s18, 1
      %p196 = scmp.lt.s32.totalorder %s19, 0
      %s197 = scalar_select %p196, %s19, 0
      %s198 = sadd.s32 %s197, %s195
      %s199 = smul.addr %s198, 8
      %s200 = scalar_lea.vmem %s0, %s199
      %s201 = smul.u32 16, %s19
      %p202 = scmp.lt.s32.totalorder %s201, 15
      %s203 = scalar_select %p202, %s201, 15
      %s204 = smul.addr %s203, 8
      %s205 = scalar_lea.vmem %s1, %s204
      %s206 = smul.u32 16, %s19
      %p207 = scmp.lt.s32.totalorder %s18, 1
      %s208 = scalar_select %p207, %s18, 1
      %s209 = smul.addr %s208, 8
      %s210 = scalar_lea.vmem %s3, %s209
      %p211 = scmp.eq.s32.totalorder %s19, 0
      // Predicated region
      $region33: #{prenorm.1} parent=31 // pred_check
        %p212 = pneg %p211
      $region34: #{prenorm.1} parent=31 // pred_check_branch
        %214 = sbr.rel (%p212) target = $region36
      $region35: #{prenorm.1} parent=31 // pred_region
        %215 = vst [vmem:[#allocation2] sm:$0xff] 0.0
      $region36: #{prenorm.1} parent=31 // pred_fallthru
        _
      %v216 = vld [vmem:[#allocation2] sm:$0xff]
      %v217 = vld [vmem:[%s200] sm:$0xff]
      %v218 = vld [vmem:[%s205] sm:$0xff]
      %v219 = vld [vmem:[%s205 + $0x8] sm:$0xff]
      %v220 = vld [vmem:[%s205 + $0x10] sm:$0xff]
      %v221 = vld [vmem:[%s205 + $0x18] sm:$0xff]
      %v222 = vld [vmem:[%s205 + $0x20] sm:$0xff]
      %v223 = vld [vmem:[%s205 + $0x28] sm:$0xff]
      %v224 = vld [vmem:[%s205 + $0x30] sm:$0xff]
      %v225 = vld [vmem:[%s205 + $0x38] sm:$0xff]
      %v226 = vld [vmem:[%s205 + $0x40] sm:$0xff]
      %v227 = vld [vmem:[%s205 + $0x48] sm:$0xff]
      %v228 = vld [vmem:[%s205 + $0x50] sm:$0xff]
      %v229 = vld [vmem:[%s205 + $0x58] sm:$0xff]
      %v230 = vld [vmem:[%s205 + $0x60] sm:$0xff]
      %v231 = vld [vmem:[%s205 + $0x68] sm:$0xff]
      %v232 = vld [vmem:[%s205 + $0x70] sm:$0xff]
      %v233 = vld [vmem:[%s205 + $0x78] sm:$0xff]
      %234 = vmatprep.subr.mxu0 0.0
      %235 = vmatpush1.msra.mxu0 %v233
      %236 = vmatprep.subr.mxu0 0.0
      %237 = vmatpush1.msra.mxu0 %v232
      %238 = vmatprep.subr.mxu0 0.0
      %239 = vmatpush1.msra.mxu0 %v231
      %240 = vmatprep.subr.mxu0 0.0
      %241 = vmatpush1.msra.mxu0 %v230
      %242 = vmatprep.subr.mxu0 0.0
      %243 = vmatpush1.msra.mxu0 %v229
      %244 = vmatprep.subr.mxu0 0.0
      %245 = vmatpush1.msra.mxu0 %v228
      %246 = vmatprep.subr.mxu0 0.0
      %247 = vmatpush1.msra.mxu0 %v227
      %248 = vmatprep.subr.mxu0 0.0
      %249 = vmatpush1.msra.mxu0 %v226
      %250 = vmatprep.subr.mxu0 0.0
      %251 = vmatpush1.msra.mxu0 %v225
      %252 = vmatprep.subr.mxu0 0.0
      %253 = vmatpush1.msra.mxu0 %v224
      %254 = vmatprep.subr.mxu0 0.0
      %255 = vmatpush1.msra.mxu0 %v223
      %256 = vmatprep.subr.mxu0 0.0
      %257 = vmatpush1.msra.mxu0 %v222
      %258 = vmatprep.subr.mxu0 0.0
      %259 = vmatpush1.msra.mxu0 %v221
      %260 = vmatprep.subr.mxu0 0.0
      %261 = vmatpush1.msra.mxu0 %v220
      %262 = vmatprep.subr.mxu0 0.0
      %263 = vmatpush1.msra.mxu0 %v219
      %264 = vmatprep.subr.mxu0 0.0
      %265 = vmatpush1.msra.mxu0 %v218
      %266 = vmatprep.subr.mxu0 0.0
      %267 = vmatpush2.msra.mxu0 0.0
      %268 = vmatprep.subr.mxu0 0.0
      %269 = vmatpush2.msra.mxu0 0.0
      %270 = vmatprep.subr.mxu0 0.0
      %271 = vmatpush2.msra.mxu0 0.0
      %272 = vmatprep.subr.mxu0 0.0
      %273 = vmatpush2.msra.mxu0 0.0
      %274 = vmatprep.subr.mxu0 0.0
      %275 = vmatpush2.msra.mxu0 0.0
      %276 = vmatprep.subr.mxu0 0.0
      %277 = vmatpush2.msra.mxu0 0.0
      %278 = vmatprep.subr.mxu0 0.0
      %279 = vmatpush2.msra.mxu0 0.0
      %280 = vmatprep.subr.mxu0 0.0
      %281 = vmatpush2.msra.mxu0 0.0
      %282 = vmatprep.subr.mxu0 0.0
      %283 = vmatpush2.msra.mxu0 0.0
      %284 = vmatprep.subr.mxu0 0.0
      %285 = vmatpush2.msra.mxu0 0.0
      %286 = vmatprep.subr.mxu0 0.0
      %287 = vmatpush2.msra.mxu0 0.0
      %288 = vmatprep.subr.mxu0 0.0
      %289 = vmatpush2.msra.mxu0 0.0
      %290 = vmatprep.subr.mxu0 0.0
      %291 = vmatpush2.msra.mxu0 0.0
      %292 = vmatprep.subr.mxu0 0.0
      %293 = vmatpush2.msra.mxu0 0.0
      %294 = vmatprep.subr.mxu0 0.0
      %295 = vmatpush2.msra.mxu0 0.0
      %296 = vmatprep.subr.mxu0 0.0
      %297 = vmatpush2.msra.mxu0 0.0
      %298 = vmatprep.mubr.f32.mxu0 0.0
      %299 = vmatmul.mubr.f32.gmra.mxu0 %v217
      %v300 = vpop.f32.mrf.mxu0
      %v301 = vadd.f32 0.0, %v300
      %v302 = vpop.f32.mrf.mxu0
      %303 = vdwg.mxu0
      %v304 = vadd.f32 %v216, %v301
      %305 = vst [vmem:[#allocation2] sm:$0xff] %v304
      // Predicated region
      $region37: #{prenorm.1} parent=31 // pred_check
        %p306 = pneg %p211
      $region38: #{prenorm.1} parent=31 // pred_check_branch
        %308 = sbr.rel (%p306) target = $region40
      $region39: #{prenorm.1} parent=31 // pred_region
        %v309 = vld [vmem:[#allocation2] sm:$0xff]
        %v310 = vld [vmem:[%s2] sm:$0x1]
        %v311 = vlaneseq
        %v312 = vshrl.u32 %v311, 7
        %v313 = vsub.s32 0, %v312
        %v314 = vrot.slane %v310, %v313
        %v315 = vadd.f32 %v309, %v314
        %316 = vadd.xlane.f32.xlu0 %v315
        %v317 = vpop.xlane.xlu0 %316
        %v318 = vmul.f32 %v317, 0.03125
        %v319 = vsub.f32 %v315, %v318
        %v320 = vlaneseq
        %v321 = vand.u32 %v320, 127
        %vm322 = vcmp.lt.s32.totalorder %v321, 32
        %v323 = vsel %vm322, %v319, 0.0
        %v324 = vmul.f32 %v323, %v323
        %325 = vadd.xlane.f32.xlu0 %v324
        %v326 = vpop.xlane.xlu0 %325
        %v327 = vmul.f32 %v326, 0.03125
        %v328 = vadd.f32 %v327, 1e-05
        %v329 = vrsqrt.pop %v328
        %v330 = vmul.f32 %v323, %v329
        %v331 = vld [vmem:[%s2 + $0x1] sm:$0x1]
        %v332 = vlaneseq
        %v333 = vshrl.u32 %v332, 7
        %v334 = vsub.s32 0, %v333
        %v335 = vrot.slane %v331, %v334
        %v336 = vmul.f32 %v330, %v335
        %v337 = vld [vmem:[%s2 + $0x2] sm:$0x1]
        %v338 = vlaneseq
        %v339 = vshrl.u32 %v338, 7
        %v340 = vsub.s32 0, %v339
        %v341 = vrot.slane %v337, %v340
        %v342 = vadd.f32 %v336, %v341
        %343 = vst [vmem:[%s210] sm:$0xff] %v342
      $region40: #{prenorm.1} parent=31 // pred_fallthru
        _
      %p344 = scmp.lt.s32.totalorder %s18, 1
      %s345 = scalar_select %p344, %s18, 1
      %s346 = smul.addr %s345, 8
      %s347 = scalar_lea.vmem %s3, %s346
      // Predicated region
      $region41: #{prenorm.1} parent=31 // pred_check
        %p348 = pneg %p119
      $region42: #{prenorm.1} parent=31 // pred_check_branch
        %350 = sbr.rel (%p348) target = $region44
      $region43: #{prenorm.1} parent=31 // pred_region
        _
      $region44: #{prenorm.1} parent=31 // pred_fallthru
        _
    $region32: #{prenorm.1} parent=5 // pred_fallthru
      _
    %p351 = scmp.le.s32.totalorder 2, %s9
    // Predicated region
    $region45: #{prenorm.1} parent=5 // pred_check
      %p352 = pneg %p351
    $region46: #{prenorm.1} parent=5 // pred_check_branch
      %354 = sbr.rel (%p352) target = $region48
    $region47: #{prenorm.1} parent=5 // pred_region
      %s355 = ssub.s32 %s9, 2
      // Predicated region
      $region49: #{prenorm.1} parent=47 // pred_check
        %p356 = pneg %p125
      $region50: #{prenorm.1} parent=47 // pred_check_branch
        %358 = sbr.rel (%p356) target = $region52
      $region51: #{prenorm.1} parent=47 // pred_region
        %p359 = scmp.lt.s32.totalorder %s20, 1
        %s360 = scalar_select %p359, %s20, 1
        %s361 = smul.addr %s360, 8
        %s362 = scalar_lea.vmem %s3, %s361
      $region52: #{prenorm.1} parent=47 // pred_fallthru
        _
    $region48: #{prenorm.1} parent=5 // pred_fallthru
      _
  $region6: #{prenorm.1} parent=0 // loop_footer
    %s13 = sadd.s32 1, %s9
  $region7: #{prenorm.1} parent=0 // loop_footer_branch
    %8 = sbr.rel target = $region3
  $region8: #{prenorm.1} parent=0 // loop_exit
    _

</llo_original>
